<compile_context>
chip_gen: v6e
topology: v6e:2x2x1
jax: 0.10.0
libtpu: 0.0.40
codegen_flags: <defaults>
</compile_context>

<pallas_src>
import functools

import jax
import jax.numpy as jnp
from jax.experimental import pallas as pl
from jax.experimental.pallas import tpu as pltpu

EPS = 1e-5  # nn.BatchNorm2d default eps


def _round_up(n, m):
    return (n + m - 1) // m * m


def _tpu_tuning():
    """(multi_tensorcore, target_row_tile, vmem_limit_bytes) per TPU generation."""
    try:
        kind = jax.devices()[0].device_kind.lower()
    except Exception:  # pragma: no cover
        kind = ""
    multicore = any(tag in kind for tag in ("v4", "v5p", "v7"))
    if "v7" in kind:
        # v7x: 64 MiB physical VMEM -> cap the working set, tm <= 2048.
        return multicore, 2048, 40 * 1024 * 1024
    # v5e / v6e: 128 MiB VMEM; default scoped limit is small -> raise explicitly.
    return multicore, 4096, 60 * 1024 * 1024


# --------------------------------------------------------------------------
# Patch extraction (single cheap XLA pass over x) + matching weight reorder
# --------------------------------------------------------------------------
def extract_taps(x_nchw, kh=3, kw=3, stride=2):
    """NCHW f32 -> tap-stacked NHWC bf16 patches (N, OH, OW, kh*kw*C).

    K layout is tap-major / channel-minor: k = (i*kw + j)*C + c.  Only x itself
    is transposed/cast (9x smaller than the patch matrix); the strided tap
    slices + concat are a single fused gather pass in XLA.
    """
    xh = jnp.transpose(x_nchw, (0, 2, 3, 1)).astype(jnp.bfloat16)   # (N,H,W,C)
    N, H, W, C = xh.shape
    OH = (H - kh) // stride + 1
    OW = (W - kw) // stride + 1
    taps = [xh[:, i:i + stride * OH:stride, j:j + stride * OW:stride, :]
            for i in range(kh) for j in range(kw)]
    return jnp.concatenate(taps, axis=-1), OH, OW      # (N, OH, OW, kh*kw*C)


def conv_weight_matrix(conv_w):
    """PyTorch conv weight (E, C, kh, kw) -> (K, E) matching extract_taps' K order."""
    E = conv_w.shape[0]
    return jnp.transpose(conv_w, (2, 3, 1, 0)).reshape(-1, E)


# --------------------------------------------------------------------------
# Kernel 1: fused conv-as-matmul + per-clip BN-stat / pooling accumulation
# --------------------------------------------------------------------------
def conv_bn_pool(patches, w, *, tm, n_outer, n_mid, n_t, cpt, seg_len, b_pad,
                 vmem_limit_bytes, single_buffer_weights):
    """patches: (rows_pad, K) bf16, rows grouped per clip and zero-padded so
    every tm-row tile covers `cpt` whole clip segments of seg_len rows each.
    w: (K, E_pad) bf16 resident conv weight.

    Returns per-outer-core partial per-clip statistics:
      bsum, bssq: (n_outer, b_pad, E_pad) f32
        bsum[o, b] = sum over clip-b tokens seen by core o of y[:, e]
        bssq[o, b] = sum over clip-b tokens seen by core o of y[:, e]^2
    Zero-padded patch rows contribute exactly zero to both.
    """
    rows_pad, K = patches.shape
    E_pad = w.shape[1]

    def kernel(p_ref, w_ref, bsum_ref, bssq_ref):
        o = pl.program_id(0)
        m = pl.program_id(1)
        t = pl.program_id(2)

        @pl.when(jnp.logical_and(m == 0, t == 0))
        def _():
            bsum_ref[...] = jnp.zeros_like(bsum_ref)
            bssq_ref[...] = jnp.zeros_like(bssq_ref)

        # One fused-K MXU matmul per tile: bf16 operands, f32 accumulator.
        y = jnp.dot(p_ref[...], w_ref[...], preferred_element_type=jnp.float32)
        ysq = y * y

        # Per-clip sum(y) / sum(y^2) as plain sublane reductions accumulated
        # into the clip's row of the resident stat block.  (Replaces the old
        # fp32 one-hot matmuls: ~18% extra MXU pushes per tile, multi-pass on
        # v5e's bf16-only MXU, plus per-tile iota/compare VPU work.)
        clip0 = (o * n_mid + m) * cpt
        for c in range(cpt):                     # static unroll, cpt is small
            seg = y[c * seg_len:(c + 1) * seg_len, :]        # sublane-aligned
            seg_sq = ysq[c * seg_len:(c + 1) * seg_len, :]
            s1 = jnp.sum(seg, axis=0, keepdims=True)         # (1, E_pad)
            s2 = jnp.sum(seg_sq, axis=0, keepdims=True)
            row = pl.ds(clip0 + c, 1)
            bsum_ref[row, :] = bsum_ref[row, :] + s1
            bssq_ref[row, :] = bssq_ref[row, :] + s2

    w_spec_kwargs = {}
    if single_buffer_weights:
        # Constant index map -> weights are never re-fetched; double-buffering
        # them is pure VMEM waste (headroom goes into a larger tm).
        w_spec_kwargs["pipeline_mode"] = pl.Buffered(1)

    cost = pl.CostEstimate(
        flops=2 * rows_pad * K * E_pad,
        transcendentals=0,
        bytes_accessed=(rows_pad * K * 2 + K * E_pad * 2
                        + 2 * n_outer * b_pad * E_pad * 4),
    )

    return pl.pallas_call(
        kernel,
        out_shape=(
            jax.ShapeDtypeStruct((n_outer, b_pad, E_pad), jnp.float32),
            jax.ShapeDtypeStruct((n_outer, b_pad, E_pad), jnp.float32),
        ),
        grid=(n_outer, n_mid, n_t),
        in_specs=[
            pl.BlockSpec((tm, K), lambda o, m, t: ((o * n_mid + m) * n_t + t, 0)),
            pl.BlockSpec((K, E_pad), lambda o, m, t: (0, 0), **w_spec_kwargs),
        ],
        out_specs=[
            pl.BlockSpec((None, b_pad, E_pad), lambda o, m, t: (o, 0, 0)),
            pl.BlockSpec((None, b_pad, E_pad), lambda o, m, t: (o, 0, 0)),
        ],
        compiler_params=pltpu.CompilerParams(
            # Outer axis shards across TensorCores (v4/v5p/v7x only); inner axes
            # accumulate into the resident per-clip stat blocks.
            dimension_semantics=("parallel", "arbitrary", "arbitrary"),
            vmem_limit_bytes=vmem_limit_bytes,
        ),
        cost_estimate=cost,
    )(patches, w)


# --------------------------------------------------------------------------
# Kernel 2: BN finalize (single scale/shift FMA) + pooling normalize + Linear
# --------------------------------------------------------------------------
def bn_pool_head(bsum_p, bssq_p, gamma, beta, fc_w, fc_b, *, m_total, rows_per_clip):
    n_outer, b_pad, E_pad = bsum_p.shape
    NC_pad = fc_w.shape[1]
    inv_m = 1.0 / float(m_total)
    inv_rpc = 1.0 / float(rows_per_clip)

    def kernel(bsum_ref, bssq_ref, g_ref, bt_ref, w_ref, b_ref, o_ref):
        bsum = jnp.sum(bsum_ref[...], axis=0)            # (b_pad, E_pad) per-clip sums
        ssq = jnp.sum(bssq_ref[...], axis=0)             # (b_pad, E_pad)

        total = jnp.sum(bsum, axis=0, keepdims=True)     # (1, E_pad) global sum(y)
        total_sq = jnp.sum(ssq, axis=0, keepdims=True)   # (1, E_pad) global sum(y^2)
        mean = total * inv_m
        # TODO(synk): E[y^2]-E[y]^2 can cancel for large-mean activations; a
        # pre-shifted / Welford-style accumulation in kernel 1 would be safer.
        var = jnp.maximum(total_sq * inv_m - mean * mean, 0.0)

        # BN folded into one per-channel FMA (training-mode stats; the conv
        # bias cancels exactly inside (y - mean)).
        scale = g_ref[...] * jax.lax.rsqrt(var + EPS)    # (1, E_pad)
        shift = bt_ref[...] - mean * scale               # (1, E_pad)

        # AdaptiveAvgPool1d(1) over the (t h w) token axis, then Linear.
        pooled = bsum * inv_rpc * scale + shift          # (b_pad, E_pad)
        o_ref[...] = (
            jnp.dot(pooled, w_ref[...], preferred_element_type=jnp.float32)
            + b_ref[...]
        )

    return pl.pallas_call(
        kernel,
        out_shape=jax.ShapeDtypeStruct((b_pad, NC_pad), jnp.float32),
        grid=(1,),
        in_specs=[
            pl.BlockSpec((n_outer, b_pad, E_pad), lambda i: (0, 0, 0)),
            pl.BlockSpec((n_outer, b_pad, E_pad), lambda i: (0, 0, 0)),
            pl.BlockSpec((1, E_pad), lambda i: (0, 0)),
            pl.BlockSpec((1, E_pad), lambda i: (0, 0)),
            pl.BlockSpec((E_pad, NC_pad), lambda i: (0, 0)),
            pl.BlockSpec((1, NC_pad), lambda i: (0, 0)),
        ],
        out_specs=pl.BlockSpec((b_pad, NC_pad), lambda i: (0, 0)),
    )(bsum_p, bssq_p, gamma, beta, fc_w, fc_b)


# --------------------------------------------------------------------------
# Glue (plain JAX)
# --------------------------------------------------------------------------
def video_lightformer_forward(x, params, num_frames):
    BT, C, H, W = x.shape
    B = BT // num_frames
    E = params["conv_w"].shape[0]
    NC = params["fc_w"].shape[0]

    multicore, tm_target, vmem_limit = _tpu_tuning()
    n_outer = 2 if multicore else 1

    # f: conv patch extraction, 'b c h w -> b (h w) c' token order, bf16 taps.
    taps, OH, OW = extract_taps(x)              # (BT, OH, OW, K)
    K = taps.shape[-1]
    rpb = num_frames * OH * OW                  # tokens per clip ('(t n)' axis)
    M = B * rpb                                 # true token count

    # Demo-size override so the accumulation / clip-boundary / padding paths
    # are all exercised even at tiny shapes.
    if M <= 512:
        tm_target = 64

    # Row-tile geometry: tiles are aligned to zero-padded per-clip segments so
    # per-clip stats are plain axis-0 reductions (no one-hot matmuls).
    rpb8 = _round_up(rpb, 8)
    if tm_target >= rpb8:
        # Case A: each tile covers `cpt` whole clips.
        cpt = max(1, min(tm_target // rpb8, max(1, B // n_outer)))
        b_rows = _round_up(B, n_outer * cpt)    # padded clip count
        rpb_pad = rpb8
        seg_len = rpb_pad
        tm = cpt * rpb_pad
        n_t = 1
    else:
        # Case B: each clip is split into n_t tiles of tm rows.
        cpt = 1
        tm = tm_target                          # multiple of 8
        rpb_pad = _round_up(rpb, tm)
        seg_len = tm
        n_t = rpb_pad // tm
        b_rows = _round_up(B, n_outer)
    n_mid = b_rows // (n_outer * cpt)

    # Lane/sublane-friendly parameter padding.  E > 128 is padded to a multiple
    # of 256 to use the full MXU width on v6e/v7x.
    E_pad = _round_up(E, 128) if E <= 128 else _round_up(E, 256)
    NC_pad = _round_up(NC, 128)
    b_pad = _round_up(max(b_rows, 8), 8)

    # Clip-grouped, zero-padded bf16 patch matrix (single fused pad, no extra
    # f32 round trip).  Zero rows contribute zero to all accumulated stats.
    patches = taps.reshape(B, rpb, K)
    patches = jnp.pad(patches, ((0, b_rows - B), (0, rpb_pad - rpb), (0, 0)))
    patches = patches.reshape(b_rows * rpb_pad, K)
    assert patches.shape[0] == n_outer * n_mid * n_t * tm

    w_ke = conv_weight_matrix(params["conv_w"]).astype(jnp.bfloat16)   # (K, E)
    w_p = jnp.zeros((K, E_pad), jnp.bfloat16).at[:, :E].set(w_ke)

    run_k1 = functools.partial(
        conv_bn_pool, patches, w_p, tm=tm, n_outer=n_outer, n_mid=n_mid, n_t=n_t,
        cpt=cpt, seg_len=seg_len, b_pad=b_pad, vmem_limit_bytes=vmem_limit)
    try:
        bsum_p, bssq_p = jax.block_until_ready(run_k1(single_buffer_weights=True))
    except Exception:
        # TODO(synk): pl.Buffered(1) single-buffered resident weights rejected
        # on this jax build; fall back to default double-buffering.
        bsum_p, bssq_p = run_k1(single_buffer_weights=False)

    # g / h Transformers are identity; their rearranges only permute tokens and
    # cannot change the per-clip mean, so they are absorbed by the fused pooling.
    gamma_p = jnp.zeros((1, E_pad), jnp.float32).at[0, :E].set(params["bn_gamma"])
    beta_p = jnp.zeros((1, E_pad), jnp.float32).at[0, :E].set(params["bn_beta"])
    fcw_p = jnp.zeros((E_pad, NC_pad), jnp.float32).at[:E, :NC].set(params["fc_w"].T)
    fcb_p = jnp.zeros((1, NC_pad), jnp.float32).at[0, :NC].set(params["fc_b"])

    logits_p = bn_pool_head(bsum_p, bssq_p, gamma_p, beta_p, fcw_p, fcb_p,
                            m_total=M, rows_per_clip=rpb)
    return logits_p[:B, :NC]


# --------------------------------------------------------------------------
# Parameters, pure-JAX reference, driver
# --------------------------------------------------------------------------
def make_params(key, c_in, embed_dim, num_classes):
    k1, k2, k3, k4 = jax.random.split(key, 4)
    return {
        # nn.Conv2d(c_in, embed_dim, kernel_size=3, stride=2)
        "conv_w": 0.05 * jax.random.normal(k1, (embed_dim, c_in, 3, 3), jnp.float32),
        "conv_b": 0.05 * jax.random.normal(k2, (embed_dim,), jnp.float32),
        # nn.BatchNorm2d(embed_dim): default affine init
        "bn_gamma": jnp.ones((embed_dim,), jnp.float32),
        "bn_beta": jnp.zeros((embed_dim,), jnp.float32),
        # nn.Linear(embed_dim, num_classes)
        "fc_w": 0.05 * jax.random.normal(k3, (num_classes, embed_dim), jnp.float32),
        "fc_b": 0.05 * jax.random.normal(k4, (num_classes,), jnp.float32),
    }


def reference_forward(x, params, num_frames):
    """Pure-JAX reference (same bf16 conv-matmul precision; includes the conv
    bias, which training-mode BN cancels exactly)."""
    taps, OH, OW = extract_taps(x)
    N = x.shape[0]
    E = params["conv_w"].shape[0]
    K = taps.shape[-1]
    patches = taps.reshape(N * OH * OW, K)
    w_ke = conv_weight_matrix(params["conv_w"]).astype(jnp.bfloat16)
    y = jnp.dot(patches, w_ke, preferred_element_type=jnp.float32) + params["conv_b"]
    mean = jnp.mean(y, axis=0, keepdims=True)
    var = jnp.mean((y - mean) ** 2, axis=0, keepdims=True)
    yn = params["bn_gamma"] * (y - mean) * jax.lax.rsqrt(var + EPS) + params["bn_beta"]
    b = N // num_frames
    tokens = yn.reshape(b, num_frames * OH * OW, E)
    pooled = jnp.mean(tokens, axis=1)
    return pooled @ params["fc_w"].T + params["fc_b"]


if __name__ == "__main__":
    batch = 2
    num_frames = 4          # small stand-in for num_frames=16
    c_backbone = 16         # small stand-in for efficientnet-b0's 320 channels
    embed_dim = 32
    num_classes = 10
    H = W = 11              # conv 3x3 stride 2 -> 5x5 = 25 tokens / frame

    key = jax.random.PRNGKey(0)
    kx, kp = jax.random.split(key)
    # x plays the role of the backbone's last feature map: (B*T, C, H, W)
    x = jax.random.normal(kx, (batch * num_frames, c_backbone, H, W), jnp.float32)
    params = make_params(kp, c_backbone, embed_dim, num_classes)

    out = video_lightformer_forward(x, params, num_frames)
    out = jax.block_until_ready(out)
    assert out.shape == (batch, num_classes), out.shape
    assert bool(jnp.all(jnp.isfinite(out)))

    ref = reference_forward(x, params, num_frames)
    assert bool(jnp.allclose(out, ref, rtol=2e-2, atol=2e-3)), (
        float(jnp.max(jnp.abs(out - ref))))

    print("KERNEL_OK")
</pallas_src>

<mosaic_0001>
module attributes {stable_mosaic.version = 11 : i64} {
  func.func @kernel(%arg0: i32, %arg1: i32, %arg2: i32, %arg3: memref<64x144xbf16, #tpu.memory_space<vmem>>, %arg4: memref<144x128xbf16, #tpu.memory_space<vmem>>, %arg5: memref<1x8x128xf32, #tpu.memory_space<vmem>>, %arg6: memref<1x8x128xf32, #tpu.memory_space<vmem>>) attributes {dimension_semantics = [#tpu.dimension_semantics<parallel>, #tpu.dimension_semantics<arbitrary>, #tpu.dimension_semantics<arbitrary>], iteration_bounds = array<i64: 1, 2, 2>, scalar_prefetch = 0 : i64, scratch_operands = 0 : i64, tpu.core_type = #tpu.core_type<tc>, window_params = [{transform_indices = @transform_0, window_bounds = array<i64: 64, 144>}, {pipeline_mode = #tpu.pipeline_mode<synchronous>, transform_indices = @transform_1, window_bounds = array<i64: 144, 128>}, {transform_indices = @transform_2, window_bounds = array<i64: 1, 8, 128>}, {transform_indices = @transform_3, window_bounds = array<i64: 1, 8, 128>}]} {
    %c0_i32 = arith.constant 0 : i32
    %0 = arith.cmpi eq, %arg1, %c0_i32 : i32
    %c0_i32_0 = arith.constant 0 : i32
    %1 = arith.cmpi eq, %arg2, %c0_i32_0 : i32
    %2 = arith.andi %0, %1 : i1
    %3 = arith.extui %2 : i1 to i32
    %c0_i32_1 = arith.constant 0 : i32
    %4 = arith.cmpi ne, %3, %c0_i32_1 : i32
    scf.if %4 {
      %cst_16 = arith.constant 0.000000e+00 : f32
      %33 = vector.broadcast %cst_16 : f32 to vector<8x128xf32>
      %c0_17 = arith.constant 0 : index
      %c0_18 = arith.constant 0 : index
      %c0_19 = arith.constant 0 : index
      %34 = vector.load %arg5[%c0_17, %c0_18, %c0_19] : memref<1x8x128xf32, #tpu.memory_space<vmem>>, vector<1x8x128xf32>
      %35 = vector.shape_cast %34 : vector<1x8x128xf32> to vector<8x128xf32>
      %36 = vector.shape_cast %33 : vector<8x128xf32> to vector<1x8x128xf32>
      tpu.vector_store %arg5[%c0_17, %c0_18, %c0_19], %36 {strides = array<i32>} : memref<1x8x128xf32, #tpu.memory_space<vmem>>, vector<1x8x128xf32>,
      %cst_20 = arith.constant 0.000000e+00 : f32
      %37 = vector.broadcast %cst_20 : f32 to vector<8x128xf32>
      %c0_21 = arith.constant 0 : index
      %c0_22 = arith.constant 0 : index
      %c0_23 = arith.constant 0 : index
      %38 = vector.load %arg6[%c0_21, %c0_22, %c0_23] : memref<1x8x128xf32, #tpu.memory_space<vmem>>, vector<1x8x128xf32>
      %39 = vector.shape_cast %38 : vector<1x8x128xf32> to vector<8x128xf32>
      %40 = vector.shape_cast %37 : vector<8x128xf32> to vector<1x8x128xf32>
      tpu.vector_store %arg6[%c0_21, %c0_22, %c0_23], %40 {strides = array<i32>} : memref<1x8x128xf32, #tpu.memory_space<vmem>>, vector<1x8x128xf32>,
    } else {
    }
    %c0 = arith.constant 0 : index
    %c0_2 = arith.constant 0 : index
    %5 = vector.load %arg3[%c0, %c0_2] : memref<64x144xbf16, #tpu.memory_space<vmem>>, vector<64x144xbf16>
    %c0_3 = arith.constant 0 : index
    %c0_4 = arith.constant 0 : index
    %6 = vector.load %arg4[%c0_3, %c0_4] : memref<144x128xbf16, #tpu.memory_space<vmem>>, vector<144x128xbf16>
    %cst = arith.constant dense<0.000000e+00> : vector<64x128xf32>
    %7 = tpu.matmul %5, %6, %cst {dimension_numbers = #tpu.dot_dimension_numbers<[1], [0], [0], [1], [0, 0, 1, 1], [], []>} : vector<64x144xbf16>, vector<144x128xbf16>, vector<64x128xf32> -> vector<64x128xf32>
    %8 = arith.mulf %7, %7 : vector<64x128xf32>
    %c2_i32 = arith.constant 2 : i32
    %9 = arith.muli %arg0, %c2_i32 : i32
    %10 = arith.addi %9, %arg1 : i32
    %c1_i32 = arith.constant 1 : i32
    %11 = arith.muli %10, %c1_i32 : i32
    %cst_5 = arith.constant dense<0.000000e+00> : vector<128xf32>
    %12 = vector.multi_reduction <add>, %7, %cst_5 [0] : vector<64x128xf32> to vector<128xf32>
    %13 = vector.shape_cast %12 : vector<128xf32> to vector<1x128xf32>
    %cst_6 = arith.constant dense<0.000000e+00> : vector<128xf32>
    %14 = vector.multi_reduction <add>, %8, %cst_6 [0] : vector<64x128xf32> to vector<128xf32>
    %15 = vector.shape_cast %14 : vector<128xf32> to vector<1x128xf32>
    %c0_i32_7 = arith.constant 0 : i32
    %16 = arith.addi %11, %c0_i32_7 : i32
    %c0_8 = arith.constant 0 : index
    %17 = arith.index_cast %16 : i32 to index
    %c0_9 = arith.constant 0 : index
    %18 = vector.load %arg5[%c0_8, %17, %c0_9] : memref<1x8x128xf32, #tpu.memory_space<vmem>>, vector<1x1x128xf32>
    %19 = vector.shape_cast %18 : vector<1x1x128xf32> to vector<1x128xf32>
    %20 = arith.addf %19, %13 : vector<1x128xf32>
    %c0_10 = arith.constant 0 : index
    %21 = arith.index_cast %16 : i32 to index
    %c0_11 = arith.constant 0 : index
    %22 = vector.load %arg5[%c0_10, %21, %c0_11] : memref<1x8x128xf32, #tpu.memory_space<vmem>>, vector<1x1x128xf32>
    %23 = vector.shape_cast %22 : vector<1x1x128xf32> to vector<1x128xf32>
    %24 = vector.shape_cast %20 : vector<1x128xf32> to vector<1x1x128xf32>
    tpu.vector_store %arg5[%c0_10, %21, %c0_11], %24 {strides = array<i32>} : memref<1x8x128xf32, #tpu.memory_space<vmem>>, vector<1x1x128xf32>,
    %c0_12 = arith.constant 0 : index
    %25 = arith.index_cast %16 : i32 to index
    %c0_13 = arith.constant 0 : index
    %26 = vector.load %arg6[%c0_12, %25, %c0_13] : memref<1x8x128xf32, #tpu.memory_space<vmem>>, vector<1x1x128xf32>
    %27 = vector.shape_cast %26 : vector<1x1x128xf32> to vector<1x128xf32>
    %28 = arith.addf %27, %15 : vector<1x128xf32>
    %c0_14 = arith.constant 0 : index
    %29 = arith.index_cast %16 : i32 to index
    %c0_15 = arith.constant 0 : index
    %30 = vector.load %arg6[%c0_14, %29, %c0_15] : memref<1x8x128xf32, #tpu.memory_space<vmem>>, vector<1x1x128xf32>
    %31 = vector.shape_cast %30 : vector<1x1x128xf32> to vector<1x128xf32>
    %32 = vector.shape_cast %28 : vector<1x128xf32> to vector<1x1x128xf32>
    tpu.vector_store %arg6[%c0_14, %29, %c0_15], %32 {strides = array<i32>} : memref<1x8x128xf32, #tpu.memory_space<vmem>>, vector<1x1x128xf32>,
    return
  }
  func.func @transform_0(%arg0: i32, %arg1: i32, %arg2: i32) -> (i32, i32) {
    %c2_i32 = arith.constant 2 : i32
    %0 = arith.muli %arg0, %c2_i32 : i32
    %1 = arith.addi %0, %arg1 : i32
    %c2_i32_0 = arith.constant 2 : i32
    %2 = arith.muli %1, %c2_i32_0 : i32
    %3 = arith.addi %2, %arg2 : i32
    %c0_i32 = arith.constant 0 : i32
    %c0_i32_1 = arith.constant 0 : i32
    return %3, %c0_i32 : i32, i32
  }
  func.func @transform_1(%arg0: i32, %arg1: i32, %arg2: i32) -> (i32, i32) {
    %c0_i32 = arith.constant 0 : i32
    %c0_i32_0 = arith.constant 0 : i32
    %c0_i32_1 = arith.constant 0 : i32
    return %c0_i32, %c0_i32_0 : i32, i32
  }
  func.func @transform_2(%arg0: i32, %arg1: i32, %arg2: i32) -> (i32, i32, i32) {
    %c0_i32 = arith.constant 0 : i32
    %c0_i32_0 = arith.constant 0 : i32
    %c0_i32_1 = arith.constant 0 : i32
    return %arg0, %c0_i32, %c0_i32_0 : i32, i32, i32
  }
  func.func @transform_3(%arg0: i32, %arg1: i32, %arg2: i32) -> (i32, i32, i32) {
    %c0_i32 = arith.constant 0 : i32
    %c0_i32_0 = arith.constant 0 : i32
    %c0_i32_1 = arith.constant 0 : i32
    return %arg0, %c0_i32, %c0_i32_0 : i32, i32, i32
  }
}

module attributes {stable_mosaic.version = 11 : i64} {
  func.func @kernel(%arg0: i32, %arg1: i32, %arg2: i32, %arg3: memref<64x144xbf16, #tpu.memory_space<vmem>>, %arg4: memref<144x128xbf16, #tpu.memory_space<vmem>>, %arg5: memref<1x8x128xf32, #tpu.memory_space<vmem>>, %arg6: memref<1x8x128xf32, #tpu.memory_space<vmem>>) attributes {dimension_semantics = [#tpu.dimension_semantics<parallel>, #tpu.dimension_semantics<arbitrary>, #tpu.dimension_semantics<arbitrary>], iteration_bounds = array<i64: 1, 2, 2>, scalar_prefetch = 0 : i64, scratch_operands = 0 : i64, tpu.core_type = #tpu.core_type<tc>, window_params = [{transform_indices = @transform_0, window_bounds = array<i64: 64, 144>}, {pipeline_mode = #tpu.pipeline_mode<synchronous>, transform_indices = @transform_1, window_bounds = array<i64: 144, 128>}, {transform_indices = @transform_2, window_bounds = array<i64: 1, 8, 128>}, {transform_indices = @transform_3, window_bounds = array<i64: 1, 8, 128>}]} {
    %c0_i32 = arith.constant 0 : i32
    %0 = arith.cmpi eq, %arg1, %c0_i32 : i32
    %c0_i32_0 = arith.constant 0 : i32
    %1 = arith.cmpi eq, %arg2, %c0_i32_0 : i32
    %2 = arith.andi %0, %1 : i1
    %3 = arith.extui %2 : i1 to i32
    %c0_i32_1 = arith.constant 0 : i32
    %4 = arith.cmpi ne, %3, %c0_i32_1 : i32
    scf.if %4 {
      %cst_16 = arith.constant 0.000000e+00 : f32
      %33 = vector.broadcast %cst_16 : f32 to vector<8x128xf32>
      %c0_17 = arith.constant 0 : index
      %c0_18 = arith.constant 0 : index
      %c0_19 = arith.constant 0 : index
      %34 = vector.load %arg5[%c0_17, %c0_18, %c0_19] : memref<1x8x128xf32, #tpu.memory_space<vmem>>, vector<1x8x128xf32>
      %35 = vector.shape_cast %34 : vector<1x8x128xf32> to vector<8x128xf32>
      %36 = vector.shape_cast %33 : vector<8x128xf32> to vector<1x8x128xf32>
      tpu.vector_store %arg5[%c0_17, %c0_18, %c0_19], %36 {strides = array<i32>} : memref<1x8x128xf32, #tpu.memory_space<vmem>>, vector<1x8x128xf32>,
      %cst_20 = arith.constant 0.000000e+00 : f32
      %37 = vector.broadcast %cst_20 : f32 to vector<8x128xf32>
      %c0_21 = arith.constant 0 : index
      %c0_22 = arith.constant 0 : index
      %c0_23 = arith.constant 0 : index
      %38 = vector.load %arg6[%c0_21, %c0_22, %c0_23] : memref<1x8x128xf32, #tpu.memory_space<vmem>>, vector<1x8x128xf32>
      %39 = vector.shape_cast %38 : vector<1x8x128xf32> to vector<8x128xf32>
      %40 = vector.shape_cast %37 : vector<8x128xf32> to vector<1x8x128xf32>
      tpu.vector_store %arg6[%c0_21, %c0_22, %c0_23], %40 {strides = array<i32>} : memref<1x8x128xf32, #tpu.memory_space<vmem>>, vector<1x8x128xf32>,
    } else {
    }
    %c0 = arith.constant 0 : index
    %c0_2 = arith.constant 0 : index
    %5 = vector.load %arg3[%c0, %c0_2] : memref<64x144xbf16, #tpu.memory_space<vmem>>, vector<64x144xbf16>
    %c0_3 = arith.constant 0 : index
    %c0_4 = arith.constant 0 : index
    %6 = vector.load %arg4[%c0_3, %c0_4] : memref<144x128xbf16, #tpu.memory_space<vmem>>, vector<144x128xbf16>
    %cst = arith.constant dense<0.000000e+00> : vector<64x128xf32>
    %7 = tpu.matmul %5, %6, %cst {dimension_numbers = #tpu.dot_dimension_numbers<[1], [0], [0], [1], [0, 0, 1, 1], [], []>} : vector<64x144xbf16>, vector<144x128xbf16>, vector<64x128xf32> -> vector<64x128xf32>
    %8 = arith.mulf %7, %7 : vector<64x128xf32>
    %c2_i32 = arith.constant 2 : i32
    %9 = arith.muli %arg0, %c2_i32 : i32
    %10 = arith.addi %9, %arg1 : i32
    %c1_i32 = arith.constant 1 : i32
    %11 = arith.muli %10, %c1_i32 : i32
    %cst_5 = arith.constant dense<0.000000e+00> : vector<128xf32>
    %12 = vector.multi_reduction <add>, %7, %cst_5 [0] : vector<64x128xf32> to vector<128xf32>
    %13 = vector.shape_cast %12 : vector<128xf32> to vector<1x128xf32>
    %cst_6 = arith.constant dense<0.000000e+00> : vector<128xf32>
    %14 = vector.multi_reduction <add>, %8, %cst_6 [0] : vector<64x128xf32> to vector<128xf32>
    %15 = vector.shape_cast %14 : vector<128xf32> to vector<1x128xf32>
    %c0_i32_7 = arith.constant 0 : i32
    %16 = arith.addi %11, %c0_i32_7 : i32
    %c0_8 = arith.constant 0 : index
    %17 = arith.index_cast %16 : i32 to index
    %c0_9 = arith.constant 0 : index
    %18 = vector.load %arg5[%c0_8, %17, %c0_9] : memref<1x8x128xf32, #tpu.memory_space<vmem>>, vector<1x1x128xf32>
    %19 = vector.shape_cast %18 : vector<1x1x128xf32> to vector<1x128xf32>
    %20 = arith.addf %19, %13 : vector<1x128xf32>
    %c0_10 = arith.constant 0 : index
    %21 = arith.index_cast %16 : i32 to index
    %c0_11 = arith.constant 0 : index
    %22 = vector.load %arg5[%c0_10, %21, %c0_11] : memref<1x8x128xf32, #tpu.memory_space<vmem>>, vector<1x1x128xf32>
    %23 = vector.shape_cast %22 : vector<1x1x128xf32> to vector<1x128xf32>
    %24 = vector.shape_cast %20 : vector<1x128xf32> to vector<1x1x128xf32>
    tpu.vector_store %arg5[%c0_10, %21, %c0_11], %24 {strides = array<i32>} : memref<1x8x128xf32, #tpu.memory_space<vmem>>, vector<1x1x128xf32>,
    %c0_12 = arith.constant 0 : index
    %25 = arith.index_cast %16 : i32 to index
    %c0_13 = arith.constant 0 : index
    %26 = vector.load %arg6[%c0_12, %25, %c0_13] : memref<1x8x128xf32, #tpu.memory_space<vmem>>, vector<1x1x128xf32>
    %27 = vector.shape_cast %26 : vector<1x1x128xf32> to vector<1x128xf32>
    %28 = arith.addf %27, %15 : vector<1x128xf32>
    %c0_14 = arith.constant 0 : index
    %29 = arith.index_cast %16 : i32 to index
    %c0_15 = arith.constant 0 : index
    %30 = vector.load %arg6[%c0_14, %29, %c0_15] : memref<1x8x128xf32, #tpu.memory_space<vmem>>, vector<1x1x128xf32>
    %31 = vector.shape_cast %30 : vector<1x1x128xf32> to vector<1x128xf32>
    %32 = vector.shape_cast %28 : vector<1x128xf32> to vector<1x1x128xf32>
    tpu.vector_store %arg6[%c0_14, %29, %c0_15], %32 {strides = array<i32>} : memref<1x8x128xf32, #tpu.memory_space<vmem>>, vector<1x1x128xf32>,
    return
  }
  func.func @transform_0(%arg0: i32, %arg1: i32, %arg2: i32) -> (i32, i32) {
    %c2_i32 = arith.constant 2 : i32
    %0 = arith.muli %arg0, %c2_i32 : i32
    %1 = arith.addi %0, %arg1 : i32
    %c2_i32_0 = arith.constant 2 : i32
    %2 = arith.muli %1, %c2_i32_0 : i32
    %3 = arith.addi %2, %arg2 : i32
    %c0_i32 = arith.constant 0 : i32
    %c0_i32_1 = arith.constant 0 : i32
    return %3, %c0_i32 : i32, i32
  }
  func.func @transform_1(%arg0: i32, %arg1: i32, %arg2: i32) -> (i32, i32) {
    %c0_i32 = arith.constant 0 : i32
    %c0_i32_0 = arith.constant 0 : i32
    %c0_i32_1 = arith.constant 0 : i32
    return %c0_i32, %c0_i32_0 : i32, i32
  }
  func.func @transform_2(%arg0: i32, %arg1: i32, %arg2: i32) -> (i32, i32, i32) {
    %c0_i32 = arith.constant 0 : i32
    %c0_i32_0 = arith.constant 0 : i32
    %c0_i32_1 = arith.constant 0 : i32
    return %arg0, %c0_i32, %c0_i32_0 : i32, i32, i32
  }
  func.func @transform_3(%arg0: i32, %arg1: i32, %arg2: i32) -> (i32, i32, i32) {
    %c0_i32 = arith.constant 0 : i32
    %c0_i32_0 = arith.constant 0 : i32
    %c0_i32_1 = arith.constant 0 : i32
    return %arg0, %c0_i32, %c0_i32_0 : i32, i32, i32
  }
}

</mosaic_0001>

<llo_original>
// kernel: tpu_custom_call.1
$region0: #{tpu_custom_call.1}
  #allocation0 [shape = 'u32[]', space=smem, size = 0x4, offset = 0x4, fixed_abs, tag = 'smem constant byte address 0x4 - core index']
  #allocation1 [shape = 'u32[144,128]{1,0:T(1,128)}', space=vmem, size = 0x12000, scoped, tag = 'internal scratch']
  %s0 = inlined_call_operand.vmem [shape: bf16[256,144], index: 0, kind: input, shape index: {}]
  %s1 = inlined_call_operand.vmem [shape: bf16[144,128], index: 1, kind: input, shape index: {}]
  %s2 = inlined_call_operand.hbm [shape: f32[1,8,128], index: 2, kind: output, shape index: {0}]
  %s3 = inlined_call_operand.hbm [shape: f32[1,8,128], index: 3, kind: output, shape index: {1}]
  %4 = xla_tuple %s2, %s3
  %s5 = sld [smem:[#allocation0]]
  $region53: #{tpu_custom_call.1} parent=0
    _
  %s7 = ssub.s32 1, %s5
  %s8 = scalar_select 0, %s7, %s5
  $region1: #{tpu_custom_call.1} parent=0
    #allocation2 [shape = 'u8[4096]{0}', space=vmem, size = 0x1000, scoped, tag = 'output window, operand 0, single buffered']
    #allocation3 [shape = 's32[2]{0}', space=sflag, size = 0x8, scoped, tag = 'scoped memory for tpu_custom_call.1']
    #allocation4 [shape = 'u8[4096]{0}', space=vmem, size = 0x1000, scoped, tag = 'output window, operand 1, single buffered']
    #allocation5 [shape = 's32[1]{0}', space=sflag, size = 0x4, scoped, tag = 'scoped memory for tpu_custom_call.1']
    %9 = vsyncpa [#allocation3], 0
    %10 = vsyncpa [#allocation5], 0
    loop: start=0, step=1, limit=6
    $region2: #{tpu_custom_call.1} parent=1 // loop_pre_header
      _
    $region3: #{tpu_custom_call.1} parent=1 // loop_header
      %s12 = sphi 0, %s16
      %p13 = scmp.ge.s32.totalorder %s12, 6
      %s19 = sphi 0, %s38
      %s20 = sphi 0, %s34
      %s21 = sphi 0, %s30
      %s22 = sphi 0, %s19
      %s23 = sphi 0, %s20
      %s24 = sphi 0, %s21
      %s25 = sphi 0, %s22
      %s26 = sphi 0, %s23
      %s27 = sphi 0, %s24
      %s49 = sphi 0, %s51
      %s52 = sphi 0, %s49
      %s53 = sphi 0, %s52
      %s69 = sphi 0, %s53
      %s73 = sphi 0, %s73
      %s75 = sphi 0, %s73
      %s76 = sphi 0, %s75
      %s90 = sphi 0, %s76
      %s96 = sphi 0, %s98
      %s99 = sphi 0, %s96
      %s100 = sphi 0, %s99
      %s116 = sphi 0, %s100
      %s122 = sphi 0, %s124
      %s125 = sphi 0, %s122
      %s126 = sphi 0, %s125
      %s142 = sphi 0, %s126
    $region4: #{tpu_custom_call.1} parent=1 // loop_header_branch
      %15 = sbr.rel (%p13) target = $region8
    $region5: #{tpu_custom_call.1} parent=1 // loop_body
      %s17 = ssub.s32 %s12, 1
      %s18 = ssub.s32 %s12, 2
      %s28 = sadd.s32 1, %s21
      %p29 = scmp.ge.s32.totalorder %s28, 2
      %s30 = scalar_select %p29, 0, %s28
      %s31 = sadd.s32 1, %s20
      %s32 = scalar_select %p29, %s31, %s20
      %p33 = scmp.ge.s32.totalorder %s32, 2
      %s34 = scalar_select %p33, 0, %s32
      %s35 = sadd.s32 1, %s19
      %s36 = scalar_select %p33, %s35, %s19
      %p37 = scmp.ge.s32.totalorder %s36, 1
      %s38 = scalar_select %p37, 0, %s36
      %s39 = smul.u32 %s19, 2
      %s40 = sadd.s32 %s39, %s20
      %s41 = smul.u32 %s40, 2
      %s42 = sadd.s32 %s41, %s21
      %s43 = smul.u32 %s38, 2
      %s44 = sadd.s32 %s43, %s34
      %s45 = smul.u32 %s44, 2
      %s46 = sadd.s32 %s45, %s30
      %s47 = ssub.s32 %s42, %s46
      %p48 = scmp.eq.s32.totalorder %s47, 0
      %s50 = sadd.s32 %s49, 1
      %s51 = scalar_select %p48, %s49, %s50
      %p54 = pneg %p48
      %p55 = scmp.eq.s32.totalorder %s12, 3
      %p56 = por %p54, %p55
      %p57 = scmp.ne.s32.totalorder %s49, %s52
      %p58 = scmp.eq.s32.totalorder %s12, 0
      %p59 = por %p57, %p58
      %p60 = scmp.ne.s32.totalorder %s49, %s52
      %p61 = scmp.eq.s32.totalorder %s17, 3
      %p62 = por %p60, %p61
      %p63 = scmp.ne.s32.totalorder %s52, %s53
      %p64 = scmp.eq.s32.totalorder %s17, 0
      %p65 = por %p63, %p64
      %p66 = scmp.ne.s32.totalorder %s52, %s53
      %p67 = scmp.eq.s32.totalorder %s18, 3
      %p68 = por %p66, %p67
      %p70 = scmp.ne.s32.totalorder %s53, %s69
      %p71 = scmp.eq.s32.totalorder %s18, 0
      %p72 = por %p70, %p71
      %s74 = sadd.s32 %s73, 1
      %p77 = scmp.eq.s32.totalorder %s12, 3
      %p78 = scmp.ne.s32.totalorder %s73, %s75
      %p79 = scmp.eq.s32.totalorder %s12, 0
      %p80 = por %p78, %p79
      %p81 = scmp.ne.s32.totalorder %s73, %s75
      %p82 = scmp.eq.s32.totalorder %s17, 3
      %p83 = por %p81, %p82
      %p84 = scmp.ne.s32.totalorder %s75, %s76
      %p85 = scmp.eq.s32.totalorder %s17, 0
      %p86 = por %p84, %p85
      %p87 = scmp.ne.s32.totalorder %s75, %s76
      %p88 = scmp.eq.s32.totalorder %s18, 3
      %p89 = por %p87, %p88
      %p91 = scmp.ne.s32.totalorder %s76, %s90
      %p92 = scmp.eq.s32.totalorder %s18, 0
      %p93 = por %p91, %p92
      %s94 = ssub.s32 %s19, %s38
      %p95 = scmp.eq.s32.totalorder %s94, 0
      %s97 = sadd.s32 %s96, 1
      %s98 = scalar_select %p95, %s96, %s97
      %p101 = pneg %p95
      %p102 = scmp.eq.s32.totalorder %s12, 3
      %p103 = por %p101, %p102
      %p104 = scmp.ne.s32.totalorder %s96, %s99
      %p105 = scmp.eq.s32.totalorder %s12, 0
      %p106 = por %p104, %p105
      %p107 = scmp.ne.s32.totalorder %s96, %s99
      %p108 = scmp.eq.s32.totalorder %s17, 3
      %p109 = por %p107, %p108
      %p110 = scmp.ne.s32.totalorder %s99, %s100
      %p111 = scmp.eq.s32.totalorder %s17, 0
      %p112 = por %p110, %p111
      %p113 = scmp.ne.s32.totalorder %s99, %s100
      %p114 = scmp.eq.s32.totalorder %s18, 3
      %p115 = por %p113, %p114
      %p117 = scmp.ne.s32.totalorder %s100, %s116
      %p118 = scmp.eq.s32.totalorder %s18, 0
      %p119 = por %p117, %p118
      %s120 = ssub.s32 %s19, %s38
      %p121 = scmp.eq.s32.totalorder %s120, 0
      %s123 = sadd.s32 %s122, 1
      %s124 = scalar_select %p121, %s122, %s123
      %p127 = pneg %p121
      %p128 = scmp.eq.s32.totalorder %s12, 3
      %p129 = por %p127, %p128
      %p130 = scmp.ne.s32.totalorder %s122, %s125
      %p131 = scmp.eq.s32.totalorder %s12, 0
      %p132 = por %p130, %p131
      %p133 = scmp.ne.s32.totalorder %s122, %s125
      %p134 = scmp.eq.s32.totalorder %s17, 3
      %p135 = por %p133, %p134
      %p136 = scmp.ne.s32.totalorder %s125, %s126
      %p137 = scmp.eq.s32.totalorder %s17, 0
      %p138 = por %p136, %p137
      %p139 = scmp.ne.s32.totalorder %s125, %s126
      %p140 = scmp.eq.s32.totalorder %s18, 3
      %p141 = por %p139, %p140
      %p143 = scmp.ne.s32.totalorder %s126, %s142
      %p144 = scmp.eq.s32.totalorder %s18, 0
      %p145 = por %p143, %p144
      %p146 = scmp.le.s32.totalorder 1, %s12
      %p147 = scmp.lt.s32.totalorder %s12, 5
      %p148 = pnand %p146, %p147
      %p149 = pneg %p148
      // Predicated region
      $region9: #{tpu_custom_call.1} parent=5 // pred_check
        _
      $region10: #{tpu_custom_call.1} parent=5 // pred_check_branch
        %151 = sbr.rel (%p148) target = $region12
      $region11: #{tpu_custom_call.1} parent=5 // pred_region
        %s152 = ssub.s32 %s12, 1
        // Predicated region
        $region13: #{tpu_custom_call.1} parent=11 // pred_check
          %p153 = pneg %p86
        $region14: #{tpu_custom_call.1} parent=11 // pred_check_branch
          %155 = sbr.rel (%p153) target = $region16
        $region15: #{tpu_custom_call.1} parent=11 // pred_region
          _
        $region16: #{tpu_custom_call.1} parent=11 // pred_fallthru
          _
      $region12: #{tpu_custom_call.1} parent=5 // pred_fallthru
        _
      %p156 = scmp.lt.s32.totalorder %s12, 4
      // Predicated region
      $region17: #{tpu_custom_call.1} parent=5 // pred_check
        %p157 = pneg %p156
      $region18: #{tpu_custom_call.1} parent=5 // pred_check_branch
        %159 = sbr.rel (%p157) target = $region20
      $region19: #{tpu_custom_call.1} parent=5 // pred_region
        // Predicated region
        $region21: #{tpu_custom_call.1} parent=19 // pred_check
          %p160 = pneg %p59
        $region22: #{tpu_custom_call.1} parent=19 // pred_check_branch
          %162 = sbr.rel (%p160) target = $region24
        $region23: #{tpu_custom_call.1} parent=19 // pred_region
          %s163 = smul.u32 %s19, 2
          %s164 = sadd.s32 %s163, %s20
          %s165 = smul.u32 %s164, 2
          %s166 = sadd.s32 %s165, %s21
          %s167 = smul.u32 8, %s166
          %p168 = scmp.lt.s32.totalorder %s167, 31
          %s169 = scalar_select %p168, %s167, 31
          %s170 = smul.addr %s169, 2
          %s171 = smul.addr %s170, 4
          %s172 = scalar_lea.vmem %s0, %s171
          %s173 = smul.u32 %s19, 2
          %s174 = sadd.s32 %s173, %s20
          %s175 = smul.u32 %s174, 2
          %s176 = sadd.s32 %s175, %s21
          %s177 = smul.u32 8, %s176
        $region24: #{tpu_custom_call.1} parent=19 // pred_fallthru
          _
      $region20: #{tpu_custom_call.1} parent=5 // pred_fallthru
        _
      %p178 = scmp.le.s32.totalorder 1, %s12
      %p179 = scmp.lt.s32.totalorder %s12, 5
      %p180 = pnand %p178, %p179
      %p181 = pneg %p180
      // Predicated region
      $region25: #{tpu_custom_call.1} parent=5 // pred_check
        _
      $region26: #{tpu_custom_call.1} parent=5 // pred_check_branch
        %183 = sbr.rel (%p180) target = $region28
      $region27: #{tpu_custom_call.1} parent=5 // pred_region
        %s184 = ssub.s32 %s12, 1
        %s185 = smul.u32 %s22, 2
        %s186 = sadd.s32 %s185, %s23
        %s187 = smul.u32 %s186, 2
        %s188 = sadd.s32 %s187, %s24
        %s189 = smul.u32 8, %s188
        %p190 = scmp.lt.s32.totalorder %s189, 31
        %s191 = scalar_select %p190, %s189, 31
        %s192 = smul.addr %s191, 2
        %s193 = smul.addr %s192, 4
        %s194 = scalar_lea.vmem %s0, %s193
        %p195 = pneg %p65
        %p196 = pneg %p62
        %p197 = pneg %p86
        %p198 = pneg %p83
        %p199 = pneg %p112
        %p200 = pneg %p109
        %p201 = pneg %p138
        %p202 = pneg %p135
        %s203 = smul.u32 %s22, 2
        %s204 = sadd.s32 %s203, %s23
        %s205 = smul.u32 %s204, 2
        %s206 = sadd.s32 %s205, %s24
        %s207 = smul.u32 8, %s206
        %p208 = scmp.lt.s32.totalorder %s207, 31
        %s209 = scalar_select %p208, %s207, 31
        %s210 = smul.addr %s209, 2
        %s211 = smul.addr %s210, 4
        %s212 = scalar_lea.vmem %s0, %s211
        %s213 = smul.u32 %s22, 2
        %s214 = sadd.s32 %s213, %s23
        %s215 = smul.u32 %s214, 2
        %s216 = sadd.s32 %s215, %s24
        %s217 = smul.u32 8, %s216
        %p219 = scmp.eq.s32.totalorder %s23, 0
        %p220 = scmp.eq.s32.totalorder %s24, 0
        %p221 = pnand %p219, %p220
        %p222 = pneg %p221
        // Predicated region
        $region29: #{tpu_custom_call.1} parent=27 // pred_check
          _
        $region30: #{tpu_custom_call.1} parent=27 // pred_check_branch
          %224 = sbr.rel (%p221) target = $region32
        $region31: #{tpu_custom_call.1} parent=27 // pred_region
          %225 = vst [vmem:[#allocation2] sm:$0xff] 0.0
          %226 = vst [vmem:[#allocation4] sm:$0xff] 0.0
        $region32: #{tpu_custom_call.1} parent=27 // pred_fallthru
          _
        %v227 = vld [vmem:[%s212] sm:$0xff]
        %v228 = vld [vmem:[%s212 + $0x8] sm:$0xff]
        %v229 = vld [vmem:[%s212 + $0x10] sm:$0xff]
        %v230 = vld [vmem:[%s212 + $0x18] sm:$0xff]
        %v231 = vld [vmem:[%s212 + $0x20] sm:$0xff]
        %v232 = vld [vmem:[%s212 + $0x28] sm:$0xff]
        %v233 = vld [vmem:[%s212 + $0x30] sm:$0xff]
        %v234 = vld [vmem:[%s212 + $0x38] sm:$0xff]
        %v235 = vld [vmem:[%s1] sm:$0xf]
        %v236 = vld [vmem:[%s1 + $0x4] sm:$0xf]
        %v237 = vld [vmem:[%s1 + $0x8] sm:$0xf]
        %v238 = vld [vmem:[%s1 + $0xc] sm:$0xf]
        %v239 = vld [vmem:[%s1 + $0x10] sm:$0xf]
        %v240 = vld [vmem:[%s1 + $0x14] sm:$0xf]
        %v241 = vld [vmem:[%s1 + $0x18] sm:$0xf]
        %v242 = vld [vmem:[%s1 + $0x1c] sm:$0xf]
        %v243 = vld [vmem:[%s1 + $0x20] sm:$0xf]
        %v244 = vld [vmem:[%s1 + $0x24] sm:$0xf]
        %v245 = vld [vmem:[%s1 + $0x28] sm:$0xf]
        %v246 = vld [vmem:[%s1 + $0x2c] sm:$0xf]
        %v247 = vld [vmem:[%s1 + $0x30] sm:$0xf]
        %v248 = vld [vmem:[%s1 + $0x34] sm:$0xf]
        %v249 = vld [vmem:[%s1 + $0x38] sm:$0xf]
        %v250 = vld [vmem:[%s1 + $0x3c] sm:$0xf]
        %v251 = vld [vmem:[%s1 + $0x40] sm:$0xf]
        %v252 = vld [vmem:[%s1 + $0x44] sm:$0xf]
        %v261 = vunpack.c.l.b16 %v227
        %v262 = vunpack.c.h.b16 %v227
        %v263 = vunpack.c.l.b16 %v228
        %v264 = vunpack.c.h.b16 %v228
        %v265 = vunpack.c.l.b16 %v229
        %v266 = vunpack.c.h.b16 %v229
        %v267 = vunpack.c.l.b16 %v230
        %v268 = vunpack.c.h.b16 %v230
        %v269 = vunpack.c.l.b16 %v231
        %v270 = vunpack.c.h.b16 %v231
        %v271 = vunpack.c.l.b16 %v232
        %v272 = vunpack.c.h.b16 %v232
        %v273 = vunpack.c.l.b16 %v233
        %v274 = vunpack.c.h.b16 %v233
        %v275 = vunpack.c.l.b16 %v234
        %v276 = vunpack.c.h.b16 %v234
        %v277 = vpack.c.b16 %v263, %v261
        %v278 = vpack.c.b16 %v264, %v262
        %v279 = vpack.c.b16 %v267, %v265
        %v280 = vpack.c.b16 %v268, %v266
        %v281 = vpack.c.b16 %v271, %v269
        %v282 = vpack.c.b16 %v272, %v270
        %v283 = vpack.c.b16 %v275, %v273
        %v284 = vpack.c.b16 %v276, %v274
        %v307 = vunpack.c.l.b16 %v235
        %v308 = vunpack.c.l.b16 %v236
        %v309 = vunpack.c.l.b16 %v237
        %v310 = vunpack.c.l.b16 %v238
        %v311 = vunpack.c.l.b16 %v239
        %v312 = vunpack.c.l.b16 %v240
        %v313 = vunpack.c.l.b16 %v241
        %v314 = vunpack.c.l.b16 %v242
        %v315 = vunpack.c.l.b16 %v243
        %v316 = vunpack.c.l.b16 %v244
        %v317 = vunpack.c.l.b16 %v245
        %v318 = vunpack.c.l.b16 %v246
        %v319 = vunpack.c.l.b16 %v247
        %v320 = vunpack.c.l.b16 %v248
        %v321 = vunpack.c.l.b16 %v249
        %v322 = vunpack.c.l.b16 %v250
        %v323 = vunpack.c.l.b16 %v251
        %v324 = vunpack.c.l.b16 %v252
        %v325 = vpack.c.b16 %v308, %v307
        %v326 = vpack.c.b16 %v310, %v309
        %v327 = vpack.c.b16 %v312, %v311
        %v328 = vpack.c.b16 %v314, %v313
        %v329 = vpack.c.b16 %v316, %v315
        %v330 = vpack.c.b16 %v318, %v317
        %v331 = vpack.c.b16 %v320, %v319
        %v332 = vpack.c.b16 %v322, %v321
        %v333 = vpack.c.b16 %v324, %v323
        %vm343 = vcmask 130048
        %v345 = vsel %vm343, %v278, 0
        %v348 = vsel %vm343, %v280, 0
        %v351 = vsel %vm343, %v282, 0
        %v354 = vsel %vm343, %v284, 0
        %356 = vmatprep.subr.bf16.mxu0 0
        %357 = vmatpush1.bf16.msra.mxu0 %v332
        %358 = vmatprep.subr.bf16.mxu0 0
        %359 = vmatpush1.bf16.msra.mxu0 %v331
        %360 = vmatprep.subr.bf16.mxu0 0
        %361 = vmatpush1.bf16.msra.mxu0 %v330
        %362 = vmatprep.subr.bf16.mxu0 0
        %363 = vmatpush1.bf16.msra.mxu0 %v329
        %364 = vmatprep.subr.bf16.mxu0 0
        %365 = vmatpush1.bf16.msra.mxu0 %v328
        %366 = vmatprep.subr.bf16.mxu0 0
        %367 = vmatpush1.bf16.msra.mxu0 %v327
        %368 = vmatprep.subr.bf16.mxu0 0
        %369 = vmatpush1.bf16.msra.mxu0 %v326
        %370 = vmatprep.subr.bf16.mxu0 0
        %371 = vmatpush1.bf16.msra.mxu0 %v325
        %372 = vmatprep.subr.bf16.mxu0 0
        %373 = vmatpush2.bf16.msra.mxu0 0
        %374 = vmatprep.subr.bf16.mxu0 0
        %375 = vmatpush2.bf16.msra.mxu0 0
        %376 = vmatprep.subr.bf16.mxu0 0
        %377 = vmatpush2.bf16.msra.mxu0 0
        %378 = vmatprep.subr.bf16.mxu0 0
        %379 = vmatpush2.bf16.msra.mxu0 0
        %380 = vmatprep.subr.bf16.mxu0 0
        %381 = vmatpush2.bf16.msra.mxu0 0
        %382 = vmatprep.subr.bf16.mxu0 0
        %383 = vmatpush2.bf16.msra.mxu0 0
        %384 = vmatprep.subr.bf16.mxu0 0
        %385 = vmatpush2.bf16.msra.mxu0 0
        %386 = vmatprep.subr.bf16.mxu0 0
        %387 = vmatpush2.bf16.msra.mxu0 %v333
        %388 = vmatprep.mubr.bf16.mxu0 %v345
        %389 = vmatmul.mubr.bf16.gmra.mxu0 %v277
        %v390 = vpop.f32.mrf.mxu0
        %v391 = vadd.f32 0.0, %v390
        %v392 = vpop.f32.mrf.mxu0
        %v393 = vpop.f32.mrf.mxu0
        %v394 = vadd.f32 0.0, %v393
        %v395 = vpop.f32.mrf.mxu0
        %396 = vmatprep.mubr.bf16.mxu0 %v348
        %397 = vmatmul.mubr.bf16.gmra.mxu0 %v279
        %v398 = vpop.f32.mrf.mxu0
        %v399 = vadd.f32 0.0, %v398
        %v400 = vpop.f32.mrf.mxu0
        %v401 = vpop.f32.mrf.mxu0
        %v402 = vadd.f32 0.0, %v401
        %v403 = vpop.f32.mrf.mxu0
        %404 = vmatprep.mubr.bf16.mxu0 %v351
        %405 = vmatmul.mubr.bf16.gmra.mxu0 %v281
        %v406 = vpop.f32.mrf.mxu0
        %v407 = vadd.f32 0.0, %v406
        %v408 = vpop.f32.mrf.mxu0
        %v409 = vpop.f32.mrf.mxu0
        %v410 = vadd.f32 0.0, %v409
        %v411 = vpop.f32.mrf.mxu0
        %412 = vmatprep.mubr.bf16.mxu0 %v354
        %413 = vmatmul.mubr.bf16.gmra.mxu0 %v283
        %v414 = vpop.f32.mrf.mxu0
        %v415 = vadd.f32 0.0, %v414
        %v416 = vpop.f32.mrf.mxu0
        %v417 = vpop.f32.mrf.mxu0
        %v418 = vadd.f32 0.0, %v417
        %v419 = vpop.f32.mrf.mxu0
        %420 = vdwg.mxu0
        %v421 = vmul.f32 %v391, %v391
        %v422 = vmul.f32 %v394, %v394
        %v423 = vmul.f32 %v399, %v399
        %v424 = vmul.f32 %v402, %v402
        %v425 = vmul.f32 %v407, %v407
        %v426 = vmul.f32 %v410, %v410
        %v427 = vmul.f32 %v415, %v415
        %v428 = vmul.f32 %v418, %v418
        %s429 = smul.u32 %s22, 2
        %s430 = sadd.s32 %s429, %s23
        %v431 = vadd.f32 %v391, %v394
        %v432 = vadd.f32 %v431, %v399
        %v433 = vadd.f32 %v432, %v402
        %v434 = vadd.f32 %v433, %v407
        %v435 = vadd.f32 %v434, %v410
        %v436 = vadd.f32 %v435, %v415
        %v437 = vadd.f32 %v436, %v418
        %v438 = vrot.slane %v437, 4
        %v439 = vadd.f32 %v437, %v438
        %v440 = vrot.slane %v439, 2
        %v441 = vadd.f32 %v439, %v440
        %v442 = vrot.slane %v441, 1
        %v443 = vadd.f32 %v441, %v442
        %v444 = vadd.f32 %v421, %v422
        %v445 = vadd.f32 %v444, %v423
        %v446 = vadd.f32 %v445, %v424
        %v447 = vadd.f32 %v446, %v425
        %v448 = vadd.f32 %v447, %v426
        %v449 = vadd.f32 %v448, %v427
        %v450 = vadd.f32 %v449, %v428
        %v451 = vrot.slane %v450, 4
        %v452 = vadd.f32 %v450, %v451
        %v453 = vrot.slane %v452, 2
        %v454 = vadd.f32 %v452, %v453
        %v455 = vrot.slane %v454, 1
        %v456 = vadd.f32 %v454, %v455
        %s457 = scalar_lea.vmem [#allocation2], %s430
        %v458 = vld [vmem:[%s457] sm:$0x1]
        %v459 = vadd.f32 %v458, %v443
        %460 = vst [vmem:[%s457] sm:$0x1] %v459
        %s461 = scalar_lea.vmem [#allocation4], %s430
        %v462 = vld [vmem:[%s461] sm:$0x1]
        %v463 = vadd.f32 %v462, %v456
        %464 = vst [vmem:[%s461] sm:$0x1] %v463
        // Predicated region
        $region33: #{tpu_custom_call.1} parent=27 // pred_check
          %p465 = pneg %p109
        $region34: #{tpu_custom_call.1} parent=27 // pred_check_branch
          %467 = sbr.rel (%p465) target = $region36
        $region35: #{tpu_custom_call.1} parent=27 // pred_region
          %s469 = ssub.s32 128, 128
          %470 = vsyncadd [#allocation3], %s469
          %s471 = smul.addr %s22, 128
          %s472 = scalar_lea.hbm %s2, %s471
          %s474 = sshll.u32 [#allocation2], 4
          %s475 = int_to_ptr.vmem [resolvable:$true] %s474
          %477 = dma.vmem_to_hbm [thread:$0]  %s475, 128, %s472, [#allocation3]
        $region36: #{tpu_custom_call.1} parent=27 // pred_fallthru
          _
        // Predicated region
        $region37: #{tpu_custom_call.1} parent=27 // pred_check
          %p478 = pneg %p135
        $region38: #{tpu_custom_call.1} parent=27 // pred_check_branch
          %480 = sbr.rel (%p478) target = $region40
        $region39: #{tpu_custom_call.1} parent=27 // pred_region
          %s482 = ssub.s32 128, 128
          %483 = vsyncadd [#allocation5], %s482
          %s484 = smul.addr %s22, 128
          %s485 = scalar_lea.hbm %s3, %s484
          %s487 = sshll.u32 [#allocation4], 4
          %s488 = int_to_ptr.vmem [resolvable:$true] %s487
          %490 = dma.vmem_to_hbm [thread:$0]  %s488, 128, %s485, [#allocation5]
        $region40: #{tpu_custom_call.1} parent=27 // pred_fallthru
          _
        // Predicated region
        $region41: #{tpu_custom_call.1} parent=27 // pred_check
          %p491 = pneg %p109
        $region42: #{tpu_custom_call.1} parent=27 // pred_check_branch
          %493 = sbr.rel (%p491) target = $region44
        $region43: #{tpu_custom_call.1} parent=27 // pred_region
          %494 = dma.done [#allocation3], 128
        $region44: #{tpu_custom_call.1} parent=27 // pred_fallthru
          _
        // Predicated region
        $region45: #{tpu_custom_call.1} parent=27 // pred_check
          %p495 = pneg %p135
        $region46: #{tpu_custom_call.1} parent=27 // pred_check_branch
          %497 = sbr.rel (%p495) target = $region48
        $region47: #{tpu_custom_call.1} parent=27 // pred_region
          %498 = dma.done [#allocation5], 128
        $region48: #{tpu_custom_call.1} parent=27 // pred_fallthru
          _
      $region28: #{tpu_custom_call.1} parent=5 // pred_fallthru
        _
      %p499 = scmp.le.s32.totalorder 2, %s12
      // Predicated region
      $region49: #{tpu_custom_call.1} parent=5 // pred_check
        %p500 = pneg %p499
      $region50: #{tpu_custom_call.1} parent=5 // pred_check_branch
        %502 = sbr.rel (%p500) target = $region52
      $region51: #{tpu_custom_call.1} parent=5 // pred_region
        %s503 = ssub.s32 %s12, 2
      $region52: #{tpu_custom_call.1} parent=5 // pred_fallthru
        _
    $region6: #{tpu_custom_call.1} parent=1 // loop_footer
      %s16 = sadd.s32 1, %s12
    $region7: #{tpu_custom_call.1} parent=1 // loop_footer_branch
      %11 = sbr.rel target = $region3
    $region8: #{tpu_custom_call.1} parent=1 // loop_exit
      _
    %504 = vsyncpa [#allocation3], 1
    %s505 = scalar_lea.sflag [#allocation3], 1
    %506 = vsyncpa %s505, 1
    %507 = vsyncpa [#allocation5], 1

// kernel: tpu_custom_call.1
$region0: #{tpu_custom_call.1}
  #allocation0 [shape = 'u32[]', space=smem, size = 0x4, offset = 0x4, fixed_abs, tag = 'smem constant byte address 0x4 - core index']
  #allocation1 [shape = 'u32[144,128]{1,0:T(1,128)}', space=vmem, size = 0x12000, scoped, tag = 'internal scratch']
  %s0 = inlined_call_operand.vmem [shape: bf16[256,144], index: 0, kind: input, shape index: {}]
  %s1 = inlined_call_operand.vmem [shape: bf16[144,128], index: 1, kind: input, shape index: {}]
  %s2 = inlined_call_operand.hbm [shape: f32[1,8,128], index: 2, kind: output, shape index: {0}]
  %s3 = inlined_call_operand.hbm [shape: f32[1,8,128], index: 3, kind: output, shape index: {1}]
  %4 = xla_tuple %s2, %s3
  %s5 = sld [smem:[#allocation0]]
  $region53: #{tpu_custom_call.1} parent=0
    _
  %s7 = ssub.s32 1, %s5
  %s8 = scalar_select 0, %s7, %s5
  $region1: #{tpu_custom_call.1} parent=0
    #allocation2 [shape = 'u8[4096]{0}', space=vmem, size = 0x1000, scoped, tag = 'output window, operand 0, single buffered']
    #allocation3 [shape = 's32[2]{0}', space=sflag, size = 0x8, scoped, tag = 'scoped memory for tpu_custom_call.1']
    #allocation4 [shape = 'u8[4096]{0}', space=vmem, size = 0x1000, scoped, tag = 'output window, operand 1, single buffered']
    #allocation5 [shape = 's32[1]{0}', space=sflag, size = 0x4, scoped, tag = 'scoped memory for tpu_custom_call.1']
    %9 = vsyncpa [#allocation3], 0
    %10 = vsyncpa [#allocation5], 0
    loop: start=0, step=1, limit=6
    $region2: #{tpu_custom_call.1} parent=1 // loop_pre_header
      _
    $region3: #{tpu_custom_call.1} parent=1 // loop_header
      %s12 = sphi 0, %s16
      %p13 = scmp.ge.s32.totalorder %s12, 6
      %s19 = sphi 0, %s38
      %s20 = sphi 0, %s34
      %s21 = sphi 0, %s30
      %s22 = sphi 0, %s19
      %s23 = sphi 0, %s20
      %s24 = sphi 0, %s21
      %s25 = sphi 0, %s22
      %s26 = sphi 0, %s23
      %s27 = sphi 0, %s24
      %s49 = sphi 0, %s51
      %s52 = sphi 0, %s49
      %s53 = sphi 0, %s52
      %s69 = sphi 0, %s53
      %s73 = sphi 0, %s73
      %s75 = sphi 0, %s73
      %s76 = sphi 0, %s75
      %s90 = sphi 0, %s76
      %s96 = sphi 0, %s98
      %s99 = sphi 0, %s96
      %s100 = sphi 0, %s99
      %s116 = sphi 0, %s100
      %s122 = sphi 0, %s124
      %s125 = sphi 0, %s122
      %s126 = sphi 0, %s125
      %s142 = sphi 0, %s126
    $region4: #{tpu_custom_call.1} parent=1 // loop_header_branch
      %15 = sbr.rel (%p13) target = $region8
    $region5: #{tpu_custom_call.1} parent=1 // loop_body
      %s17 = ssub.s32 %s12, 1
      %s18 = ssub.s32 %s12, 2
      %s28 = sadd.s32 1, %s21
      %p29 = scmp.ge.s32.totalorder %s28, 2
      %s30 = scalar_select %p29, 0, %s28
      %s31 = sadd.s32 1, %s20
      %s32 = scalar_select %p29, %s31, %s20
      %p33 = scmp.ge.s32.totalorder %s32, 2
      %s34 = scalar_select %p33, 0, %s32
      %s35 = sadd.s32 1, %s19
      %s36 = scalar_select %p33, %s35, %s19
      %p37 = scmp.ge.s32.totalorder %s36, 1
      %s38 = scalar_select %p37, 0, %s36
      %s39 = smul.u32 %s19, 2
      %s40 = sadd.s32 %s39, %s20
      %s41 = smul.u32 %s40, 2
      %s42 = sadd.s32 %s41, %s21
      %s43 = smul.u32 %s38, 2
      %s44 = sadd.s32 %s43, %s34
      %s45 = smul.u32 %s44, 2
      %s46 = sadd.s32 %s45, %s30
      %s47 = ssub.s32 %s42, %s46
      %p48 = scmp.eq.s32.totalorder %s47, 0
      %s50 = sadd.s32 %s49, 1
      %s51 = scalar_select %p48, %s49, %s50
      %p54 = pneg %p48
      %p55 = scmp.eq.s32.totalorder %s12, 3
      %p56 = por %p54, %p55
      %p57 = scmp.ne.s32.totalorder %s49, %s52
      %p58 = scmp.eq.s32.totalorder %s12, 0
      %p59 = por %p57, %p58
      %p60 = scmp.ne.s32.totalorder %s49, %s52
      %p61 = scmp.eq.s32.totalorder %s17, 3
      %p62 = por %p60, %p61
      %p63 = scmp.ne.s32.totalorder %s52, %s53
      %p64 = scmp.eq.s32.totalorder %s17, 0
      %p65 = por %p63, %p64
      %p66 = scmp.ne.s32.totalorder %s52, %s53
      %p67 = scmp.eq.s32.totalorder %s18, 3
      %p68 = por %p66, %p67
      %p70 = scmp.ne.s32.totalorder %s53, %s69
      %p71 = scmp.eq.s32.totalorder %s18, 0
      %p72 = por %p70, %p71
      %s74 = sadd.s32 %s73, 1
      %p77 = scmp.eq.s32.totalorder %s12, 3
      %p78 = scmp.ne.s32.totalorder %s73, %s75
      %p79 = scmp.eq.s32.totalorder %s12, 0
      %p80 = por %p78, %p79
      %p81 = scmp.ne.s32.totalorder %s73, %s75
      %p82 = scmp.eq.s32.totalorder %s17, 3
      %p83 = por %p81, %p82
      %p84 = scmp.ne.s32.totalorder %s75, %s76
      %p85 = scmp.eq.s32.totalorder %s17, 0
      %p86 = por %p84, %p85
      %p87 = scmp.ne.s32.totalorder %s75, %s76
      %p88 = scmp.eq.s32.totalorder %s18, 3
      %p89 = por %p87, %p88
      %p91 = scmp.ne.s32.totalorder %s76, %s90
      %p92 = scmp.eq.s32.totalorder %s18, 0
      %p93 = por %p91, %p92
      %s94 = ssub.s32 %s19, %s38
      %p95 = scmp.eq.s32.totalorder %s94, 0
      %s97 = sadd.s32 %s96, 1
      %s98 = scalar_select %p95, %s96, %s97
      %p101 = pneg %p95
      %p102 = scmp.eq.s32.totalorder %s12, 3
      %p103 = por %p101, %p102
      %p104 = scmp.ne.s32.totalorder %s96, %s99
      %p105 = scmp.eq.s32.totalorder %s12, 0
      %p106 = por %p104, %p105
      %p107 = scmp.ne.s32.totalorder %s96, %s99
      %p108 = scmp.eq.s32.totalorder %s17, 3
      %p109 = por %p107, %p108
      %p110 = scmp.ne.s32.totalorder %s99, %s100
      %p111 = scmp.eq.s32.totalorder %s17, 0
      %p112 = por %p110, %p111
      %p113 = scmp.ne.s32.totalorder %s99, %s100
      %p114 = scmp.eq.s32.totalorder %s18, 3
      %p115 = por %p113, %p114
      %p117 = scmp.ne.s32.totalorder %s100, %s116
      %p118 = scmp.eq.s32.totalorder %s18, 0
      %p119 = por %p117, %p118
      %s120 = ssub.s32 %s19, %s38
      %p121 = scmp.eq.s32.totalorder %s120, 0
      %s123 = sadd.s32 %s122, 1
      %s124 = scalar_select %p121, %s122, %s123
      %p127 = pneg %p121
      %p128 = scmp.eq.s32.totalorder %s12, 3
      %p129 = por %p127, %p128
      %p130 = scmp.ne.s32.totalorder %s122, %s125
      %p131 = scmp.eq.s32.totalorder %s12, 0
      %p132 = por %p130, %p131
      %p133 = scmp.ne.s32.totalorder %s122, %s125
      %p134 = scmp.eq.s32.totalorder %s17, 3
      %p135 = por %p133, %p134
      %p136 = scmp.ne.s32.totalorder %s125, %s126
      %p137 = scmp.eq.s32.totalorder %s17, 0
      %p138 = por %p136, %p137
      %p139 = scmp.ne.s32.totalorder %s125, %s126
      %p140 = scmp.eq.s32.totalorder %s18, 3
      %p141 = por %p139, %p140
      %p143 = scmp.ne.s32.totalorder %s126, %s142
      %p144 = scmp.eq.s32.totalorder %s18, 0
      %p145 = por %p143, %p144
      %p146 = scmp.le.s32.totalorder 1, %s12
      %p147 = scmp.lt.s32.totalorder %s12, 5
      %p148 = pnand %p146, %p147
      %p149 = pneg %p148
      // Predicated region
      $region9: #{tpu_custom_call.1} parent=5 // pred_check
        _
      $region10: #{tpu_custom_call.1} parent=5 // pred_check_branch
        %151 = sbr.rel (%p148) target = $region12
      $region11: #{tpu_custom_call.1} parent=5 // pred_region
        %s152 = ssub.s32 %s12, 1
        // Predicated region
        $region13: #{tpu_custom_call.1} parent=11 // pred_check
          %p153 = pneg %p86
        $region14: #{tpu_custom_call.1} parent=11 // pred_check_branch
          %155 = sbr.rel (%p153) target = $region16
        $region15: #{tpu_custom_call.1} parent=11 // pred_region
          _
        $region16: #{tpu_custom_call.1} parent=11 // pred_fallthru
          _
      $region12: #{tpu_custom_call.1} parent=5 // pred_fallthru
        _
      %p156 = scmp.lt.s32.totalorder %s12, 4
      // Predicated region
      $region17: #{tpu_custom_call.1} parent=5 // pred_check
        %p157 = pneg %p156
      $region18: #{tpu_custom_call.1} parent=5 // pred_check_branch
        %159 = sbr.rel (%p157) target = $region20
      $region19: #{tpu_custom_call.1} parent=5 // pred_region
        // Predicated region
        $region21: #{tpu_custom_call.1} parent=19 // pred_check
          %p160 = pneg %p59
        $region22: #{tpu_custom_call.1} parent=19 // pred_check_branch
          %162 = sbr.rel (%p160) target = $region24
        $region23: #{tpu_custom_call.1} parent=19 // pred_region
          %s163 = smul.u32 %s19, 2
          %s164 = sadd.s32 %s163, %s20
          %s165 = smul.u32 %s164, 2
          %s166 = sadd.s32 %s165, %s21
          %s167 = smul.u32 8, %s166
          %p168 = scmp.lt.s32.totalorder %s167, 31
          %s169 = scalar_select %p168, %s167, 31
          %s170 = smul.addr %s169, 2
          %s171 = smul.addr %s170, 4
          %s172 = scalar_lea.vmem %s0, %s171
          %s173 = smul.u32 %s19, 2
          %s174 = sadd.s32 %s173, %s20
          %s175 = smul.u32 %s174, 2
          %s176 = sadd.s32 %s175, %s21
          %s177 = smul.u32 8, %s176
        $region24: #{tpu_custom_call.1} parent=19 // pred_fallthru
          _
      $region20: #{tpu_custom_call.1} parent=5 // pred_fallthru
        _
      %p178 = scmp.le.s32.totalorder 1, %s12
      %p179 = scmp.lt.s32.totalorder %s12, 5
      %p180 = pnand %p178, %p179
      %p181 = pneg %p180
      // Predicated region
      $region25: #{tpu_custom_call.1} parent=5 // pred_check
        _
      $region26: #{tpu_custom_call.1} parent=5 // pred_check_branch
        %183 = sbr.rel (%p180) target = $region28
      $region27: #{tpu_custom_call.1} parent=5 // pred_region
        %s184 = ssub.s32 %s12, 1
        %s185 = smul.u32 %s22, 2
        %s186 = sadd.s32 %s185, %s23
        %s187 = smul.u32 %s186, 2
        %s188 = sadd.s32 %s187, %s24
        %s189 = smul.u32 8, %s188
        %p190 = scmp.lt.s32.totalorder %s189, 31
        %s191 = scalar_select %p190, %s189, 31
        %s192 = smul.addr %s191, 2
        %s193 = smul.addr %s192, 4
        %s194 = scalar_lea.vmem %s0, %s193
        %p195 = pneg %p65
        %p196 = pneg %p62
        %p197 = pneg %p86
        %p198 = pneg %p83
        %p199 = pneg %p112
        %p200 = pneg %p109
        %p201 = pneg %p138
        %p202 = pneg %p135
        %s203 = smul.u32 %s22, 2
        %s204 = sadd.s32 %s203, %s23
        %s205 = smul.u32 %s204, 2
        %s206 = sadd.s32 %s205, %s24
        %s207 = smul.u32 8, %s206
        %p208 = scmp.lt.s32.totalorder %s207, 31
        %s209 = scalar_select %p208, %s207, 31
        %s210 = smul.addr %s209, 2
        %s211 = smul.addr %s210, 4
        %s212 = scalar_lea.vmem %s0, %s211
        %s213 = smul.u32 %s22, 2
        %s214 = sadd.s32 %s213, %s23
        %s215 = smul.u32 %s214, 2
        %s216 = sadd.s32 %s215, %s24
        %s217 = smul.u32 8, %s216
        %p219 = scmp.eq.s32.totalorder %s23, 0
        %p220 = scmp.eq.s32.totalorder %s24, 0
        %p221 = pnand %p219, %p220
        %p222 = pneg %p221
        // Predicated region
        $region29: #{tpu_custom_call.1} parent=27 // pred_check
          _
        $region30: #{tpu_custom_call.1} parent=27 // pred_check_branch
          %224 = sbr.rel (%p221) target = $region32
        $region31: #{tpu_custom_call.1} parent=27 // pred_region
          %225 = vst [vmem:[#allocation2] sm:$0xff] 0.0
          %226 = vst [vmem:[#allocation4] sm:$0xff] 0.0
        $region32: #{tpu_custom_call.1} parent=27 // pred_fallthru
          _
        %v227 = vld [vmem:[%s212] sm:$0xff]
        %v228 = vld [vmem:[%s212 + $0x8] sm:$0xff]
        %v229 = vld [vmem:[%s212 + $0x10] sm:$0xff]
        %v230 = vld [vmem:[%s212 + $0x18] sm:$0xff]
        %v231 = vld [vmem:[%s212 + $0x20] sm:$0xff]
        %v232 = vld [vmem:[%s212 + $0x28] sm:$0xff]
        %v233 = vld [vmem:[%s212 + $0x30] sm:$0xff]
        %v234 = vld [vmem:[%s212 + $0x38] sm:$0xff]
        %v235 = vld [vmem:[%s1] sm:$0xf]
        %v236 = vld [vmem:[%s1 + $0x4] sm:$0xf]
        %v237 = vld [vmem:[%s1 + $0x8] sm:$0xf]
        %v238 = vld [vmem:[%s1 + $0xc] sm:$0xf]
        %v239 = vld [vmem:[%s1 + $0x10] sm:$0xf]
        %v240 = vld [vmem:[%s1 + $0x14] sm:$0xf]
        %v241 = vld [vmem:[%s1 + $0x18] sm:$0xf]
        %v242 = vld [vmem:[%s1 + $0x1c] sm:$0xf]
        %v243 = vld [vmem:[%s1 + $0x20] sm:$0xf]
        %v244 = vld [vmem:[%s1 + $0x24] sm:$0xf]
        %v245 = vld [vmem:[%s1 + $0x28] sm:$0xf]
        %v246 = vld [vmem:[%s1 + $0x2c] sm:$0xf]
        %v247 = vld [vmem:[%s1 + $0x30] sm:$0xf]
        %v248 = vld [vmem:[%s1 + $0x34] sm:$0xf]
        %v249 = vld [vmem:[%s1 + $0x38] sm:$0xf]
        %v250 = vld [vmem:[%s1 + $0x3c] sm:$0xf]
        %v251 = vld [vmem:[%s1 + $0x40] sm:$0xf]
        %v252 = vld [vmem:[%s1 + $0x44] sm:$0xf]
        %v261 = vunpack.c.l.b16 %v227
        %v262 = vunpack.c.h.b16 %v227
        %v263 = vunpack.c.l.b16 %v228
        %v264 = vunpack.c.h.b16 %v228
        %v265 = vunpack.c.l.b16 %v229
        %v266 = vunpack.c.h.b16 %v229
        %v267 = vunpack.c.l.b16 %v230
        %v268 = vunpack.c.h.b16 %v230
        %v269 = vunpack.c.l.b16 %v231
        %v270 = vunpack.c.h.b16 %v231
        %v271 = vunpack.c.l.b16 %v232
        %v272 = vunpack.c.h.b16 %v232
        %v273 = vunpack.c.l.b16 %v233
        %v274 = vunpack.c.h.b16 %v233
        %v275 = vunpack.c.l.b16 %v234
        %v276 = vunpack.c.h.b16 %v234
        %v277 = vpack.c.b16 %v263, %v261
        %v278 = vpack.c.b16 %v264, %v262
        %v279 = vpack.c.b16 %v267, %v265
        %v280 = vpack.c.b16 %v268, %v266
        %v281 = vpack.c.b16 %v271, %v269
        %v282 = vpack.c.b16 %v272, %v270
        %v283 = vpack.c.b16 %v275, %v273
        %v284 = vpack.c.b16 %v276, %v274
        %v307 = vunpack.c.l.b16 %v235
        %v308 = vunpack.c.l.b16 %v236
        %v309 = vunpack.c.l.b16 %v237
        %v310 = vunpack.c.l.b16 %v238
        %v311 = vunpack.c.l.b16 %v239
        %v312 = vunpack.c.l.b16 %v240
        %v313 = vunpack.c.l.b16 %v241
        %v314 = vunpack.c.l.b16 %v242
        %v315 = vunpack.c.l.b16 %v243
        %v316 = vunpack.c.l.b16 %v244
        %v317 = vunpack.c.l.b16 %v245
        %v318 = vunpack.c.l.b16 %v246
        %v319 = vunpack.c.l.b16 %v247
        %v320 = vunpack.c.l.b16 %v248
        %v321 = vunpack.c.l.b16 %v249
        %v322 = vunpack.c.l.b16 %v250
        %v323 = vunpack.c.l.b16 %v251
        %v324 = vunpack.c.l.b16 %v252
        %v325 = vpack.c.b16 %v308, %v307
        %v326 = vpack.c.b16 %v310, %v309
        %v327 = vpack.c.b16 %v312, %v311
        %v328 = vpack.c.b16 %v314, %v313
        %v329 = vpack.c.b16 %v316, %v315
        %v330 = vpack.c.b16 %v318, %v317
        %v331 = vpack.c.b16 %v320, %v319
        %v332 = vpack.c.b16 %v322, %v321
        %v333 = vpack.c.b16 %v324, %v323
        %vm343 = vcmask 130048
        %v345 = vsel %vm343, %v278, 0
        %v348 = vsel %vm343, %v280, 0
        %v351 = vsel %vm343, %v282, 0
        %v354 = vsel %vm343, %v284, 0
        %356 = vmatprep.subr.bf16.mxu0 0
        %357 = vmatpush1.bf16.msra.mxu0 %v332
        %358 = vmatprep.subr.bf16.mxu0 0
        %359 = vmatpush1.bf16.msra.mxu0 %v331
        %360 = vmatprep.subr.bf16.mxu0 0
        %361 = vmatpush1.bf16.msra.mxu0 %v330
        %362 = vmatprep.subr.bf16.mxu0 0
        %363 = vmatpush1.bf16.msra.mxu0 %v329
        %364 = vmatprep.subr.bf16.mxu0 0
        %365 = vmatpush1.bf16.msra.mxu0 %v328
        %366 = vmatprep.subr.bf16.mxu0 0
        %367 = vmatpush1.bf16.msra.mxu0 %v327
        %368 = vmatprep.subr.bf16.mxu0 0
        %369 = vmatpush1.bf16.msra.mxu0 %v326
        %370 = vmatprep.subr.bf16.mxu0 0
        %371 = vmatpush1.bf16.msra.mxu0 %v325
        %372 = vmatprep.subr.bf16.mxu0 0
        %373 = vmatpush2.bf16.msra.mxu0 0
        %374 = vmatprep.subr.bf16.mxu0 0
        %375 = vmatpush2.bf16.msra.mxu0 0
        %376 = vmatprep.subr.bf16.mxu0 0
        %377 = vmatpush2.bf16.msra.mxu0 0
        %378 = vmatprep.subr.bf16.mxu0 0
        %379 = vmatpush2.bf16.msra.mxu0 0
        %380 = vmatprep.subr.bf16.mxu0 0
        %381 = vmatpush2.bf16.msra.mxu0 0
        %382 = vmatprep.subr.bf16.mxu0 0
        %383 = vmatpush2.bf16.msra.mxu0 0
        %384 = vmatprep.subr.bf16.mxu0 0
        %385 = vmatpush2.bf16.msra.mxu0 0
        %386 = vmatprep.subr.bf16.mxu0 0
        %387 = vmatpush2.bf16.msra.mxu0 %v333
        %388 = vmatprep.mubr.bf16.mxu0 %v345
        %389 = vmatmul.mubr.bf16.gmra.mxu0 %v277
        %v390 = vpop.f32.mrf.mxu0
        %v391 = vadd.f32 0.0, %v390
        %v392 = vpop.f32.mrf.mxu0
        %v393 = vpop.f32.mrf.mxu0
        %v394 = vadd.f32 0.0, %v393
        %v395 = vpop.f32.mrf.mxu0
        %396 = vmatprep.mubr.bf16.mxu0 %v348
        %397 = vmatmul.mubr.bf16.gmra.mxu0 %v279
        %v398 = vpop.f32.mrf.mxu0
        %v399 = vadd.f32 0.0, %v398
        %v400 = vpop.f32.mrf.mxu0
        %v401 = vpop.f32.mrf.mxu0
        %v402 = vadd.f32 0.0, %v401
        %v403 = vpop.f32.mrf.mxu0
        %404 = vmatprep.mubr.bf16.mxu0 %v351
        %405 = vmatmul.mubr.bf16.gmra.mxu0 %v281
        %v406 = vpop.f32.mrf.mxu0
        %v407 = vadd.f32 0.0, %v406
        %v408 = vpop.f32.mrf.mxu0
        %v409 = vpop.f32.mrf.mxu0
        %v410 = vadd.f32 0.0, %v409
        %v411 = vpop.f32.mrf.mxu0
        %412 = vmatprep.mubr.bf16.mxu0 %v354
        %413 = vmatmul.mubr.bf16.gmra.mxu0 %v283
        %v414 = vpop.f32.mrf.mxu0
        %v415 = vadd.f32 0.0, %v414
        %v416 = vpop.f32.mrf.mxu0
        %v417 = vpop.f32.mrf.mxu0
        %v418 = vadd.f32 0.0, %v417
        %v419 = vpop.f32.mrf.mxu0
        %420 = vdwg.mxu0
        %v421 = vmul.f32 %v391, %v391
        %v422 = vmul.f32 %v394, %v394
        %v423 = vmul.f32 %v399, %v399
        %v424 = vmul.f32 %v402, %v402
        %v425 = vmul.f32 %v407, %v407
        %v426 = vmul.f32 %v410, %v410
        %v427 = vmul.f32 %v415, %v415
        %v428 = vmul.f32 %v418, %v418
        %s429 = smul.u32 %s22, 2
        %s430 = sadd.s32 %s429, %s23
        %v431 = vadd.f32 %v391, %v394
        %v432 = vadd.f32 %v431, %v399
        %v433 = vadd.f32 %v432, %v402
        %v434 = vadd.f32 %v433, %v407
        %v435 = vadd.f32 %v434, %v410
        %v436 = vadd.f32 %v435, %v415
        %v437 = vadd.f32 %v436, %v418
        %v438 = vrot.slane %v437, 4
        %v439 = vadd.f32 %v437, %v438
        %v440 = vrot.slane %v439, 2
        %v441 = vadd.f32 %v439, %v440
        %v442 = vrot.slane %v441, 1
        %v443 = vadd.f32 %v441, %v442
        %v444 = vadd.f32 %v421, %v422
        %v445 = vadd.f32 %v444, %v423
        %v446 = vadd.f32 %v445, %v424
        %v447 = vadd.f32 %v446, %v425
        %v448 = vadd.f32 %v447, %v426
        %v449 = vadd.f32 %v448, %v427
        %v450 = vadd.f32 %v449, %v428
        %v451 = vrot.slane %v450, 4
        %v452 = vadd.f32 %v450, %v451
        %v453 = vrot.slane %v452, 2
        %v454 = vadd.f32 %v452, %v453
        %v455 = vrot.slane %v454, 1
        %v456 = vadd.f32 %v454, %v455
        %s457 = scalar_lea.vmem [#allocation2], %s430
        %v458 = vld [vmem:[%s457] sm:$0x1]
        %v459 = vadd.f32 %v458, %v443
        %460 = vst [vmem:[%s457] sm:$0x1] %v459
        %s461 = scalar_lea.vmem [#allocation4], %s430
        %v462 = vld [vmem:[%s461] sm:$0x1]
        %v463 = vadd.f32 %v462, %v456
        %464 = vst [vmem:[%s461] sm:$0x1] %v463
        // Predicated region
        $region33: #{tpu_custom_call.1} parent=27 // pred_check
          %p465 = pneg %p109
        $region34: #{tpu_custom_call.1} parent=27 // pred_check_branch
          %467 = sbr.rel (%p465) target = $region36
        $region35: #{tpu_custom_call.1} parent=27 // pred_region
          %s469 = ssub.s32 128, 128
          %470 = vsyncadd [#allocation3], %s469
          %s471 = smul.addr %s22, 128
          %s472 = scalar_lea.hbm %s2, %s471
          %s474 = sshll.u32 [#allocation2], 4
          %s475 = int_to_ptr.vmem [resolvable:$true] %s474
          %477 = dma.vmem_to_hbm [thread:$0]  %s475, 128, %s472, [#allocation3]
        $region36: #{tpu_custom_call.1} parent=27 // pred_fallthru
          _
        // Predicated region
        $region37: #{tpu_custom_call.1} parent=27 // pred_check
          %p478 = pneg %p135
        $region38: #{tpu_custom_call.1} parent=27 // pred_check_branch
          %480 = sbr.rel (%p478) target = $region40
        $region39: #{tpu_custom_call.1} parent=27 // pred_region
          %s482 = ssub.s32 128, 128
          %483 = vsyncadd [#allocation5], %s482
          %s484 = smul.addr %s22, 128
          %s485 = scalar_lea.hbm %s3, %s484
          %s487 = sshll.u32 [#allocation4], 4
          %s488 = int_to_ptr.vmem [resolvable:$true] %s487
          %490 = dma.vmem_to_hbm [thread:$0]  %s488, 128, %s485, [#allocation5]
        $region40: #{tpu_custom_call.1} parent=27 // pred_fallthru
          _
        // Predicated region
        $region41: #{tpu_custom_call.1} parent=27 // pred_check
          %p491 = pneg %p109
        $region42: #{tpu_custom_call.1} parent=27 // pred_check_branch
          %493 = sbr.rel (%p491) target = $region44
        $region43: #{tpu_custom_call.1} parent=27 // pred_region
          %494 = dma.done [#allocation3], 128
        $region44: #{tpu_custom_call.1} parent=27 // pred_fallthru
          _
        // Predicated region
        $region45: #{tpu_custom_call.1} parent=27 // pred_check
          %p495 = pneg %p135
        $region46: #{tpu_custom_call.1} parent=27 // pred_check_branch
          %497 = sbr.rel (%p495) target = $region48
        $region47: #{tpu_custom_call.1} parent=27 // pred_region
          %498 = dma.done [#allocation5], 128
        $region48: #{tpu_custom_call.1} parent=27 // pred_fallthru
          _
      $region28: #{tpu_custom_call.1} parent=5 // pred_fallthru
        _
      %p499 = scmp.le.s32.totalorder 2, %s12
      // Predicated region
      $region49: #{tpu_custom_call.1} parent=5 // pred_check
        %p500 = pneg %p499
      $region50: #{tpu_custom_call.1} parent=5 // pred_check_branch
        %502 = sbr.rel (%p500) target = $region52
      $region51: #{tpu_custom_call.1} parent=5 // pred_region
        %s503 = ssub.s32 %s12, 2
      $region52: #{tpu_custom_call.1} parent=5 // pred_fallthru
        _
    $region6: #{tpu_custom_call.1} parent=1 // loop_footer
      %s16 = sadd.s32 1, %s12
    $region7: #{tpu_custom_call.1} parent=1 // loop_footer_branch
      %11 = sbr.rel target = $region3
    $region8: #{tpu_custom_call.1} parent=1 // loop_exit
      _
    %504 = vsyncpa [#allocation3], 1
    %s505 = scalar_lea.sflag [#allocation3], 1
    %506 = vsyncpa %s505, 1
    %507 = vsyncpa [#allocation5], 1

</llo_original>
